<compile_context>
chip_gen: v7x
topology: tpu7x:2x2x1
jax: 0.10.0
libtpu: 0.0.40
codegen_flags: <defaults>
</compile_context>

<pallas_src>
import functools

import jax
import jax.numpy as jnp
from jax.experimental import pallas as pl
from jax.experimental.pallas import tpu as pltpu


def _fused_kernel(step_ref, lam_ref, w_ref, p_ref, q_ref, out_ref, x_sc):
    """One grid step = one (batch b, layer k) pair.  Grid = (B, max_iter)."""
    k = pl.program_id(1)

    # Re-initialize the carried iterate at the first layer of each batch element.
    @pl.when(k == 0)
    def _():
        x_sc[...] = jnp.zeros_like(x_sc)

    w = w_ref[0]          # (N, N)    resident across the layer axis
    P = p_ref[0]          # (N, D, D) resident (= A^T A per node)
    q = q_ref[0]          # (N, D)    resident (= A^T b per node)
    x = x_sc[...]         # (N, D)    carried iterate

    # MetropolisConv: node-mixing matmul  (N,N)@(N,D) -> (N,D)              [MXU]
    conv = jnp.dot(w, x, preferred_element_type=jnp.float32)

    # tgrad_qp, refactored:  grad[n] = A[n]^T A[n] x[n] - A[n]^T b[n] = P[n] x[n] - q[n]
    Px = jnp.einsum('nij,nj->ni', P, x, preferred_element_type=jnp.float32)
    grad = Px - q

    step = step_ref[k]    # scalars from SMEM, indexed by layer id
    tau = lam_ref[k]
    z = conv - step * grad

    # act: soft-threshold  relu(z - tau) - relu(-z - tau)                   [VPU, f32]
    x_new = jnp.maximum(z - tau, 0.0) - jnp.maximum(-z - tau, 0.0)

    x_sc[...] = x_new          # carry to next layer
    out_ref[0, 0] = x_new      # write this layer's iterate into the stacked output


def _make_fused_call(B, N, D, max_iter):
    grid_spec = pltpu.PrefetchScalarGridSpec(
        num_scalar_prefetch=0,
        grid=(B, max_iter),
        in_specs=[
            pl.BlockSpec(memory_space=pltpu.SMEM),                    # step_size (max_iter,)
            pl.BlockSpec(memory_space=pltpu.SMEM),                    # lam       (max_iter,)
            pl.BlockSpec((1, N, N), lambda i, k: (i, 0, 0)),          # W   (constant over k)
            pl.BlockSpec((1, N, D, D), lambda i, k: (i, 0, 0, 0)),    # P = A^T A
            pl.BlockSpec((1, N, D), lambda i, k: (i, 0, 0)),          # q = A^T b
        ],
        out_specs=pl.BlockSpec((1, 1, N, D), lambda i, k: (k, i, 0, 0)),
        scratch_shapes=[pltpu.VMEM((N, D), jnp.float32)],             # carried iterate x
    )

    # Size scoped VMEM explicitly from the actual blocks (double-buffered inputs/output
    # + scratch) with generous headroom; keeps v7x's smaller VMEM budget deliberate.
    blk_bytes = 4 * (N * N + N * D * D + N * D + N * D + N * D)
    vmem_limit = int(min(64 << 20, max(16 << 20, 4 * blk_bytes + (2 << 20))))

    return pl.pallas_call(
        _fused_kernel,
        out_shape=jax.ShapeDtypeStruct((max_iter, B, N, D), jnp.float32),
        grid_spec=grid_spec,
        compiler_params=pltpu.CompilerParams(
            dimension_semantics=("parallel", "arbitrary"),
            vmem_limit_bytes=vmem_limit,
        ),
    )


@functools.partial(jax.jit, static_argnames=("max_iter",))
def net_prox_dgd_forward(W, A, b, step_size, lam, max_iter):
    """Mirrors Net_Prox_DGD.forward: returns (ret_z, x_final, x_hist)."""
    B, N, M, D = A.shape
    assert max_iter >= 2, "forward needs max_iter >= 2 (torch.stack(ret_z) requires it)"
    assert max_iter <= step_size.shape[0] and max_iter <= lam.shape[0], (
        "max_iter must not exceed the number of learned layers (step_size/lam length)")

    W = W.astype(jnp.float32)
    A = A.astype(jnp.float32)
    b = b.astype(jnp.float32)

    # Layer-invariant gramians, precomputed once (exact algebraic refactor of A^T(Ax-b)).
    P = jnp.einsum('bnmd,bnme->bnde', A, A)   # (B, N, D, D)
    q = jnp.einsum('bnmd,bnm->bnd', A, b)     # (B, N, D)
    # Optional for v6e/v7x: W/P could be cast to bfloat16 here (f32 accumulation stays
    # in the kernel) to halve DMA bytes; kept f32 to match reference numerics exactly.

    call = _make_fused_call(B, N, D, max_iter)
    x_all = call(step_size.astype(jnp.float32), lam.astype(jnp.float32), W, P, q)

    x_final = x_all[max_iter - 1]                       # == x_2 in the torch code
    ret_z = x_all[1:]                                   # (max_iter-1, B, N, D)
    init_x = jnp.zeros((B, N, D), jnp.float32)
    x_hist = [init_x] + [x_all[i] for i in range(max_iter)]
    return ret_z, x_final, x_hist


# ---- pure-JAX reference (original A^T(Ax-b) formulation, for a silent check) ----
def _ref_layer(step_k, lam_k, W, x, A, b):
    conv = jnp.einsum('bij,bjd->bid', W, x)
    Ax = jnp.einsum('bnmd,bnd->bnm', A, x)
    grad = jnp.einsum('bnmd,bnm->bnd', A, Ax - b)
    z = conv - step_k * grad
    return jnp.maximum(z - lam_k, 0.0) - jnp.maximum(-z - lam_k, 0.0)


def _ref_forward(W, A, b, step_size, lam, max_iter):
    B, N, M, D = A.shape
    x = jnp.zeros((B, N, D), jnp.float32)
    x = _ref_layer(step_size[0], lam[0], W, x, A, b)
    ret_z = []
    for k in range(1, max_iter):
        x = _ref_layer(step_size[k], lam[k], W, x, A, b)
        ret_z.append(x)
    return jnp.stack(ret_z), x


if __name__ == "__main__":
    # Small, deterministic example shapes.
    B, N, M, D = 2, 8, 16, 16
    num_layers = 4
    max_iter = 4
    step_size_init = 0.05

    key = jax.random.PRNGKey(0)
    k_w, k_a, k_b = jax.random.split(key, 3)

    # Deterministic "Metropolis-like" mixing matrix: symmetric, rows normalized.
    W_raw = jax.random.uniform(k_w, (B, N, N), dtype=jnp.float32)
    W_sym = 0.5 * (W_raw + jnp.swapaxes(W_raw, 1, 2))
    W = W_sym / jnp.sum(W_sym, axis=-1, keepdims=True)

    # Scales chosen so the soft-threshold is exercised non-trivially (values on both
    # sides of tau) while the unrolled iteration stays O(1).
    A = jax.random.normal(k_a, (B, N, M, D), dtype=jnp.float32) * 0.4
    b = jax.random.normal(k_b, (B, N, M), dtype=jnp.float32) * 12.0

    # Parameters as in __init__: step_size = ones(num_layers)*s, lam = ones(num_layers)*s*10
    step_size = jnp.ones((num_layers,), jnp.float32) * step_size_init
    lam = jnp.ones((num_layers,), jnp.float32) * step_size_init * 10.0

    ret_z, x_final, x_hist = net_prox_dgd_forward(W, A, b, step_size, lam,
                                                  max_iter=max_iter)
    jax.block_until_ready(ret_z)
    jax.block_until_ready(x_final)

    # Silent correctness check against the pure-JAX reference.
    ref_z, ref_x = _ref_forward(W, A, b, step_size, lam, max_iter)
    assert ret_z.shape == (max_iter - 1, B, N, D)
    assert x_final.shape == (B, N, D)
    assert len(x_hist) == max_iter + 1
    assert bool(jnp.any(jnp.abs(x_final) > 0)), "degenerate test: all outputs zero"
    assert jnp.allclose(ret_z, ref_z, atol=1e-5, rtol=1e-5)
    assert jnp.allclose(x_final, ref_x, atol=1e-5, rtol=1e-5)
    x1_ref = _ref_layer(step_size[0], lam[0], W, jnp.zeros((B, N, D), jnp.float32), A, b)
    assert jnp.allclose(x_hist[1], x1_ref, atol=1e-5, rtol=1e-5)

    print("KERNEL_OK")
</pallas_src>

<mosaic_0001>
module attributes {stable_mosaic.version = 11 : i64} {
  func.func @_fused_kernel(%arg0: i32, %arg1: i32, %arg2: memref<4xf32, #tpu.memory_space<smem>>, %arg3: memref<4xf32, #tpu.memory_space<smem>>, %arg4: memref<1x8x8xf32, #tpu.memory_space<vmem>>, %arg5: memref<1x8x16x16xf32, #tpu.memory_space<vmem>>, %arg6: memref<1x8x16xf32, #tpu.memory_space<vmem>>, %arg7: memref<1x1x8x16xf32, #tpu.memory_space<vmem>>, %arg8: memref<8x16xf32, #tpu.memory_space<vmem>>) attributes {dimension_semantics = [#tpu.dimension_semantics<parallel>, #tpu.dimension_semantics<arbitrary>], iteration_bounds = array<i64: 2, 4>, scalar_prefetch = 0 : i64, scratch_operands = 1 : i64, tpu.core_type = #tpu.core_type<tc>, window_params = [{transform_indices = @transform_0, window_bounds = array<i64: 4>}, {transform_indices = @transform_1, window_bounds = array<i64: 4>}, {transform_indices = @transform_2, window_bounds = array<i64: 1, 8, 8>}, {transform_indices = @transform_3, window_bounds = array<i64: 1, 8, 16, 16>}, {transform_indices = @transform_4, window_bounds = array<i64: 1, 8, 16>}, {transform_indices = @transform_5, window_bounds = array<i64: 1, 1, 8, 16>}]} {
    %c0_i32 = arith.constant 0 : i32
    %0 = arith.cmpi eq, %arg1, %c0_i32 : i32
    %1 = arith.extui %0 : i1 to i32
    %c0_i32_0 = arith.constant 0 : i32
    %2 = arith.cmpi ne, %1, %c0_i32_0 : i32
    scf.if %2 {
      %cst_22 = arith.constant 0.000000e+00 : f32
      %35 = vector.broadcast %cst_22 : f32 to vector<8x16xf32>
      %c0_23 = arith.constant 0 : index
      %c0_24 = arith.constant 0 : index
      %36 = vector.load %arg8[%c0_23, %c0_24] : memref<8x16xf32, #tpu.memory_space<vmem>>, vector<8x16xf32>
      tpu.vector_store %arg8[%c0_23, %c0_24], %35 {strides = array<i32>} : memref<8x16xf32, #tpu.memory_space<vmem>>, vector<8x16xf32>,
    } else {
    }
    %c0 = arith.constant 0 : index
    %c0_1 = arith.constant 0 : index
    %c0_2 = arith.constant 0 : index
    %3 = vector.load %arg4[%c0, %c0_1, %c0_2] : memref<1x8x8xf32, #tpu.memory_space<vmem>>, vector<1x8x8xf32>
    %4 = vector.shape_cast %3 : vector<1x8x8xf32> to vector<8x8xf32>
    %c0_3 = arith.constant 0 : index
    %c0_4 = arith.constant 0 : index
    %c0_5 = arith.constant 0 : index
    %c0_6 = arith.constant 0 : index
    %5 = vector.load %arg5[%c0_3, %c0_4, %c0_5, %c0_6] : memref<1x8x16x16xf32, #tpu.memory_space<vmem>>, vector<1x8x16x16xf32>
    %6 = vector.shape_cast %5 : vector<1x8x16x16xf32> to vector<8x16x16xf32>
    %c0_7 = arith.constant 0 : index
    %c0_8 = arith.constant 0 : index
    %c0_9 = arith.constant 0 : index
    %7 = vector.load %arg6[%c0_7, %c0_8, %c0_9] : memref<1x8x16xf32, #tpu.memory_space<vmem>>, vector<1x8x16xf32>
    %8 = vector.shape_cast %7 : vector<1x8x16xf32> to vector<8x16xf32>
    %c0_10 = arith.constant 0 : index
    %c0_11 = arith.constant 0 : index
    %9 = vector.load %arg8[%c0_10, %c0_11] : memref<8x16xf32, #tpu.memory_space<vmem>>, vector<8x16xf32>
    %cst = arith.constant dense<0.000000e+00> : vector<8x16xf32>
    %10 = tpu.matmul %4, %9, %cst {dimension_numbers = #tpu.dot_dimension_numbers<[1], [0], [0], [1], [0, 0, 1, 1], [], []>} : vector<8x8xf32>, vector<8x16xf32>, vector<8x16xf32> -> vector<8x16xf32>
    "tpu.trace_start"() <{level = 10 : i32, message = "nij,nj->ni"}> : () -> ()
    %cst_12 = arith.constant dense<0.000000e+00> : vector<8x16xf32>
    %11 = tpu.matmul %6, %9, %cst_12 {dimension_numbers = #tpu.dot_dimension_numbers<[2], [1], [1], [], [0, 0, 0, 1], [0], [0]>} : vector<8x16x16xf32>, vector<8x16xf32>, vector<8x16xf32> -> vector<8x16xf32>
    "tpu.trace_stop"() : () -> ()
    %12 = arith.subf %11, %8 : vector<8x16xf32>
    %13 = arith.index_cast %arg1 : i32 to index
    %14 = memref.load %arg2[%13] : memref<4xf32, #tpu.memory_space<smem>>
    %15 = arith.index_cast %arg1 : i32 to index
    %16 = memref.load %arg3[%15] : memref<4xf32, #tpu.memory_space<smem>>
    %17 = vector.broadcast %14 : f32 to vector<8x16xf32>
    %18 = arith.mulf %17, %12 : vector<8x16xf32>
    %19 = arith.subf %10, %18 : vector<8x16xf32>
    %20 = vector.broadcast %16 : f32 to vector<8x16xf32>
    %21 = arith.subf %19, %20 : vector<8x16xf32>
    %cst_13 = arith.constant 0.000000e+00 : f32
    %22 = vector.broadcast %cst_13 : f32 to vector<8x16xf32>
    %23 = arith.maximumf %21, %22 : vector<8x16xf32>
    %cst_14 = arith.constant 0.000000e+00 : f32
    %24 = vector.broadcast %cst_14 : f32 to vector<8x16xf32>
    %25 = arith.subf %24, %19 : vector<8x16xf32>
    %26 = vector.broadcast %16 : f32 to vector<8x16xf32>
    %27 = arith.subf %25, %26 : vector<8x16xf32>
    %cst_15 = arith.constant 0.000000e+00 : f32
    %28 = vector.broadcast %cst_15 : f32 to vector<8x16xf32>
    %29 = arith.maximumf %27, %28 : vector<8x16xf32>
    %30 = arith.subf %23, %29 : vector<8x16xf32>
    %c0_16 = arith.constant 0 : index
    %c0_17 = arith.constant 0 : index
    %31 = vector.load %arg8[%c0_16, %c0_17] : memref<8x16xf32, #tpu.memory_space<vmem>>, vector<8x16xf32>
    tpu.vector_store %arg8[%c0_16, %c0_17], %30 {strides = array<i32>} : memref<8x16xf32, #tpu.memory_space<vmem>>, vector<8x16xf32>,
    %c0_18 = arith.constant 0 : index
    %c0_19 = arith.constant 0 : index
    %c0_20 = arith.constant 0 : index
    %c0_21 = arith.constant 0 : index
    %32 = vector.load %arg7[%c0_18, %c0_19, %c0_20, %c0_21] : memref<1x1x8x16xf32, #tpu.memory_space<vmem>>, vector<1x1x8x16xf32>
    %33 = vector.shape_cast %32 : vector<1x1x8x16xf32> to vector<8x16xf32>
    %34 = vector.shape_cast %30 : vector<8x16xf32> to vector<1x1x8x16xf32>
    tpu.vector_store %arg7[%c0_18, %c0_19, %c0_20, %c0_21], %34 {strides = array<i32>} : memref<1x1x8x16xf32, #tpu.memory_space<vmem>>, vector<1x1x8x16xf32>,
    return
  }
  func.func @transform_0(%arg0: i32, %arg1: i32) -> i32 {
    %c0_i32 = arith.constant 0 : i32
    %c0_i32_0 = arith.constant 0 : i32
    return %c0_i32 : i32
  }
  func.func @transform_1(%arg0: i32, %arg1: i32) -> i32 {
    %c0_i32 = arith.constant 0 : i32
    %c0_i32_0 = arith.constant 0 : i32
    return %c0_i32 : i32
  }
  func.func @transform_2(%arg0: i32, %arg1: i32) -> (i32, i32, i32) {
    %c0_i32 = arith.constant 0 : i32
    %c0_i32_0 = arith.constant 0 : i32
    %c0_i32_1 = arith.constant 0 : i32
    return %arg0, %c0_i32, %c0_i32_0 : i32, i32, i32
  }
  func.func @transform_3(%arg0: i32, %arg1: i32) -> (i32, i32, i32, i32) {
    %c0_i32 = arith.constant 0 : i32
    %c0_i32_0 = arith.constant 0 : i32
    %c0_i32_1 = arith.constant 0 : i32
    %c0_i32_2 = arith.constant 0 : i32
    return %arg0, %c0_i32, %c0_i32_0, %c0_i32_1 : i32, i32, i32, i32
  }
  func.func @transform_4(%arg0: i32, %arg1: i32) -> (i32, i32, i32) {
    %c0_i32 = arith.constant 0 : i32
    %c0_i32_0 = arith.constant 0 : i32
    %c0_i32_1 = arith.constant 0 : i32
    return %arg0, %c0_i32, %c0_i32_0 : i32, i32, i32
  }
  func.func @transform_5(%arg0: i32, %arg1: i32) -> (i32, i32, i32, i32) {
    %c0_i32 = arith.constant 0 : i32
    %c0_i32_0 = arith.constant 0 : i32
    %c0_i32_1 = arith.constant 0 : i32
    return %arg1, %arg0, %c0_i32, %c0_i32_0 : i32, i32, i32, i32
  }
}

</mosaic_0001>

<llo_original>
// kernel: net_prox_dgd_forward.1
$region0: #{net_prox_dgd_forward.1}
  #allocation0 [shape = 'u32[]', space=smem, size = 0x4, offset = 0x4, fixed_abs, tag = 'smem constant byte address 0x4 - core index']
  #allocation1 [shape = 'u32[144,128]{1,0:T(1,128)}', space=vmem, size = 0x12000, scoped, tag = 'internal scratch']
  #allocation2 [shape = 'f32[8,16]{1,0:T(8,128)}', space=vmem, size = 0x1000, scoped, tag = 'scratch operand']
  %s0 = inlined_call_operand.vmem [shape: f32[4], index: 0, kind: input, shape index: {}]
  %s1 = inlined_call_operand.vmem [shape: f32[4], index: 1, kind: input, shape index: {}]
  %s2 = inlined_call_operand.vmem [shape: f32[2,8,8], index: 2, kind: input, shape index: {}]
  %s3 = inlined_call_operand.vmem [shape: f32[2,8,16,16], index: 3, kind: input, shape index: {}]
  %s4 = inlined_call_operand.vmem [shape: f32[2,8,16], index: 4, kind: input, shape index: {}]
  %s5 = inlined_call_operand.vmem [shape: f32[4,2,8,16], index: 5, kind: output, shape index: {}]
  %s6 = sld [smem:[#allocation0]]
  $region65: #{net_prox_dgd_forward.1} parent=0
    _
  %s8 = ssub.s32 1, %s6
  %s9 = scalar_select 0, %s8, %s6
  $region1: #{net_prox_dgd_forward.1} parent=0
    #allocation3 [shape = 'u8[512]{0}', space=smem, size = 0x200, scoped, tag = 'input window, operand 0, single buffered']
    #allocation4 [shape = 's32[2]{0}', space=sflag, size = 0x8, scoped, tag = 'scoped memory for net_prox_dgd_forward.1']
    #allocation5 [shape = 'u8[512]{0}', space=smem, size = 0x200, scoped, tag = 'input window, operand 1, single buffered']
    #allocation6 [shape = 's32[1]{0}', space=sflag, size = 0x4, scoped, tag = 'scoped memory for net_prox_dgd_forward.1']
    %10 = vsyncpa [#allocation4], 0
    %11 = vsyncpa [#allocation6], 0
    loop: start=0, step=1, limit=10
    $region2: #{net_prox_dgd_forward.1} parent=1 // loop_pre_header
      _
    $region3: #{net_prox_dgd_forward.1} parent=1 // loop_header
      %s13 = sphi 0, %s17
      %p14 = scmp.ge.s32.totalorder %s13, 10
      %s20 = sphi 0, %s32
      %s21 = sphi 0, %s28
      %s22 = sphi 0, %s20
      %s23 = sphi 0, %s21
      %s24 = sphi 0, %s22
      %s25 = sphi 0, %s23
      %s33 = sphi 0, %s33
      %s35 = sphi 0, %s33
      %s36 = sphi 0, %s35
      %s50 = sphi 0, %s36
      %s54 = sphi 0, %s54
      %s56 = sphi 0, %s54
      %s57 = sphi 0, %s56
      %s71 = sphi 0, %s57
      %s77 = sphi 0, %s79
      %s80 = sphi 0, %s77
      %s81 = sphi 0, %s80
      %s97 = sphi 0, %s81
      %s103 = sphi 0, %s105
      %s106 = sphi 0, %s103
      %s107 = sphi 0, %s106
      %s123 = sphi 0, %s107
      %s129 = sphi 0, %s131
      %s132 = sphi 0, %s129
      %s133 = sphi 0, %s132
      %s149 = sphi 0, %s133
      %s157 = sphi 0, %s159
      %s160 = sphi 0, %s157
      %s161 = sphi 0, %s160
      %s177 = sphi 0, %s161
    $region4: #{net_prox_dgd_forward.1} parent=1 // loop_header_branch
      %16 = sbr.rel (%p14) target = $region8
    $region5: #{net_prox_dgd_forward.1} parent=1 // loop_body
      %s18 = ssub.s32 %s13, 1
      %s19 = ssub.s32 %s13, 2
      %s26 = sadd.s32 1, %s21
      %p27 = scmp.ge.s32.totalorder %s26, 4
      %s28 = scalar_select %p27, 0, %s26
      %s29 = sadd.s32 1, %s20
      %s30 = scalar_select %p27, %s29, %s20
      %p31 = scmp.ge.s32.totalorder %s30, 2
      %s32 = scalar_select %p31, 0, %s30
      %s34 = sadd.s32 %s33, 1
      %p37 = scmp.eq.s32.totalorder %s13, 7
      %p38 = scmp.ne.s32.totalorder %s33, %s35
      %p39 = scmp.eq.s32.totalorder %s13, 0
      %p40 = por %p38, %p39
      %p41 = scmp.ne.s32.totalorder %s33, %s35
      %p42 = scmp.eq.s32.totalorder %s18, 7
      %p43 = por %p41, %p42
      %p44 = scmp.ne.s32.totalorder %s35, %s36
      %p45 = scmp.eq.s32.totalorder %s18, 0
      %p46 = por %p44, %p45
      %p47 = scmp.ne.s32.totalorder %s35, %s36
      %p48 = scmp.eq.s32.totalorder %s19, 7
      %p49 = por %p47, %p48
      %p51 = scmp.ne.s32.totalorder %s36, %s50
      %p52 = scmp.eq.s32.totalorder %s19, 0
      %p53 = por %p51, %p52
      %s55 = sadd.s32 %s54, 1
      %p58 = scmp.eq.s32.totalorder %s13, 7
      %p59 = scmp.ne.s32.totalorder %s54, %s56
      %p60 = scmp.eq.s32.totalorder %s13, 0
      %p61 = por %p59, %p60
      %p62 = scmp.ne.s32.totalorder %s54, %s56
      %p63 = scmp.eq.s32.totalorder %s18, 7
      %p64 = por %p62, %p63
      %p65 = scmp.ne.s32.totalorder %s56, %s57
      %p66 = scmp.eq.s32.totalorder %s18, 0
      %p67 = por %p65, %p66
      %p68 = scmp.ne.s32.totalorder %s56, %s57
      %p69 = scmp.eq.s32.totalorder %s19, 7
      %p70 = por %p68, %p69
      %p72 = scmp.ne.s32.totalorder %s57, %s71
      %p73 = scmp.eq.s32.totalorder %s19, 0
      %p74 = por %p72, %p73
      %s75 = ssub.s32 %s20, %s32
      %p76 = scmp.eq.s32.totalorder %s75, 0
      %s78 = sadd.s32 %s77, 1
      %s79 = scalar_select %p76, %s77, %s78
      %p82 = pneg %p76
      %p83 = scmp.eq.s32.totalorder %s13, 7
      %p84 = por %p82, %p83
      %p85 = scmp.ne.s32.totalorder %s77, %s80
      %p86 = scmp.eq.s32.totalorder %s13, 0
      %p87 = por %p85, %p86
      %p88 = scmp.ne.s32.totalorder %s77, %s80
      %p89 = scmp.eq.s32.totalorder %s18, 7
      %p90 = por %p88, %p89
      %p91 = scmp.ne.s32.totalorder %s80, %s81
      %p92 = scmp.eq.s32.totalorder %s18, 0
      %p93 = por %p91, %p92
      %p94 = scmp.ne.s32.totalorder %s80, %s81
      %p95 = scmp.eq.s32.totalorder %s19, 7
      %p96 = por %p94, %p95
      %p98 = scmp.ne.s32.totalorder %s81, %s97
      %p99 = scmp.eq.s32.totalorder %s19, 0
      %p100 = por %p98, %p99
      %s101 = ssub.s32 %s20, %s32
      %p102 = scmp.eq.s32.totalorder %s101, 0
      %s104 = sadd.s32 %s103, 1
      %s105 = scalar_select %p102, %s103, %s104
      %p108 = pneg %p102
      %p109 = scmp.eq.s32.totalorder %s13, 7
      %p110 = por %p108, %p109
      %p111 = scmp.ne.s32.totalorder %s103, %s106
      %p112 = scmp.eq.s32.totalorder %s13, 0
      %p113 = por %p111, %p112
      %p114 = scmp.ne.s32.totalorder %s103, %s106
      %p115 = scmp.eq.s32.totalorder %s18, 7
      %p116 = por %p114, %p115
      %p117 = scmp.ne.s32.totalorder %s106, %s107
      %p118 = scmp.eq.s32.totalorder %s18, 0
      %p119 = por %p117, %p118
      %p120 = scmp.ne.s32.totalorder %s106, %s107
      %p121 = scmp.eq.s32.totalorder %s19, 7
      %p122 = por %p120, %p121
      %p124 = scmp.ne.s32.totalorder %s107, %s123
      %p125 = scmp.eq.s32.totalorder %s19, 0
      %p126 = por %p124, %p125
      %s127 = ssub.s32 %s20, %s32
      %p128 = scmp.eq.s32.totalorder %s127, 0
      %s130 = sadd.s32 %s129, 1
      %s131 = scalar_select %p128, %s129, %s130
      %p134 = pneg %p128
      %p135 = scmp.eq.s32.totalorder %s13, 7
      %p136 = por %p134, %p135
      %p137 = scmp.ne.s32.totalorder %s129, %s132
      %p138 = scmp.eq.s32.totalorder %s13, 0
      %p139 = por %p137, %p138
      %p140 = scmp.ne.s32.totalorder %s129, %s132
      %p141 = scmp.eq.s32.totalorder %s18, 7
      %p142 = por %p140, %p141
      %p143 = scmp.ne.s32.totalorder %s132, %s133
      %p144 = scmp.eq.s32.totalorder %s18, 0
      %p145 = por %p143, %p144
      %p146 = scmp.ne.s32.totalorder %s132, %s133
      %p147 = scmp.eq.s32.totalorder %s19, 7
      %p148 = por %p146, %p147
      %p150 = scmp.ne.s32.totalorder %s133, %s149
      %p151 = scmp.eq.s32.totalorder %s19, 0
      %p152 = por %p150, %p151
      %s153 = ssub.s32 %s21, %s28
      %s154 = ssub.s32 %s20, %s32
      %s155 = sor.u32 %s153, %s154
      %p156 = scmp.eq.s32.totalorder %s155, 0
      %s158 = sadd.s32 %s157, 1
      %s159 = scalar_select %p156, %s157, %s158
      %p162 = pneg %p156
      %p163 = scmp.eq.s32.totalorder %s13, 7
      %p164 = por %p162, %p163
      %p165 = scmp.ne.s32.totalorder %s157, %s160
      %p166 = scmp.eq.s32.totalorder %s13, 0
      %p167 = por %p165, %p166
      %p168 = scmp.ne.s32.totalorder %s157, %s160
      %p169 = scmp.eq.s32.totalorder %s18, 7
      %p170 = por %p168, %p169
      %p171 = scmp.ne.s32.totalorder %s160, %s161
      %p172 = scmp.eq.s32.totalorder %s18, 0
      %p173 = por %p171, %p172
      %p174 = scmp.ne.s32.totalorder %s160, %s161
      %p175 = scmp.eq.s32.totalorder %s19, 7
      %p176 = por %p174, %p175
      %p178 = scmp.ne.s32.totalorder %s161, %s177
      %p179 = scmp.eq.s32.totalorder %s19, 0
      %p180 = por %p178, %p179
      %p181 = scmp.le.s32.totalorder 1, %s13
      %p182 = scmp.lt.s32.totalorder %s13, 9
      %p183 = pnand %p181, %p182
      %p184 = pneg %p183
      // Predicated region
      $region9: #{net_prox_dgd_forward.1} parent=5 // pred_check
        _
      $region10: #{net_prox_dgd_forward.1} parent=5 // pred_check_branch
        %186 = sbr.rel (%p183) target = $region12
      $region11: #{net_prox_dgd_forward.1} parent=5 // pred_region
        %s187 = ssub.s32 %s13, 1
        // Predicated region
        $region13: #{net_prox_dgd_forward.1} parent=11 // pred_check
          %p188 = pneg %p46
        $region14: #{net_prox_dgd_forward.1} parent=11 // pred_check_branch
          %190 = sbr.rel (%p188) target = $region16
        $region15: #{net_prox_dgd_forward.1} parent=11 // pred_region
          %s192 = ssub.s32 16, 16
          %193 = vsyncadd [#allocation4], %s192
          %s195 = sshll.u32 %s0, 4
          %s196 = int_to_ptr.vmem [resolvable:$true] %s195
          %198 = dma.vmem_to_smem %s196, 16, [#allocation3], [#allocation4]
        $region16: #{net_prox_dgd_forward.1} parent=11 // pred_fallthru
          _
        // Predicated region
        $region17: #{net_prox_dgd_forward.1} parent=11 // pred_check
          %p199 = pneg %p67
        $region18: #{net_prox_dgd_forward.1} parent=11 // pred_check_branch
          %201 = sbr.rel (%p199) target = $region20
        $region19: #{net_prox_dgd_forward.1} parent=11 // pred_region
          %s203 = ssub.s32 16, 16
          %204 = vsyncadd [#allocation6], %s203
          %s206 = sshll.u32 %s1, 4
          %s207 = int_to_ptr.vmem [resolvable:$true] %s206
          %209 = dma.vmem_to_smem %s207, 16, [#allocation5], [#allocation6]
        $region20: #{net_prox_dgd_forward.1} parent=11 // pred_fallthru
          _
      $region12: #{net_prox_dgd_forward.1} parent=5 // pred_fallthru
        _
      %p210 = scmp.lt.s32.totalorder %s13, 8
      // Predicated region
      $region21: #{net_prox_dgd_forward.1} parent=5 // pred_check
        %p211 = pneg %p210
      $region22: #{net_prox_dgd_forward.1} parent=5 // pred_check_branch
        %213 = sbr.rel (%p211) target = $region24
      $region23: #{net_prox_dgd_forward.1} parent=5 // pred_region
        // Predicated region
        $region25: #{net_prox_dgd_forward.1} parent=23 // pred_check
          %p214 = pneg %p87
        $region26: #{net_prox_dgd_forward.1} parent=23 // pred_check_branch
          %216 = sbr.rel (%p214) target = $region28
        $region27: #{net_prox_dgd_forward.1} parent=23 // pred_region
          %p217 = scmp.lt.s32.totalorder %s20, 1
          %s218 = scalar_select %p217, %s20, 1
          %s219 = smul.addr %s218, 8
          %s220 = scalar_lea.vmem %s2, %s219
        $region28: #{net_prox_dgd_forward.1} parent=23 // pred_fallthru
          _
        // Predicated region
        $region29: #{net_prox_dgd_forward.1} parent=23 // pred_check
          %p221 = pneg %p113
        $region30: #{net_prox_dgd_forward.1} parent=23 // pred_check_branch
          %223 = sbr.rel (%p221) target = $region32
        $region31: #{net_prox_dgd_forward.1} parent=23 // pred_region
          %p224 = scmp.lt.s32.totalorder %s20, 1
          %s225 = scalar_select %p224, %s20, 1
          %s226 = smul.addr %s225, 16
          %s227 = smul.addr %s226, 8
          %s228 = scalar_lea.vmem %s3, %s227
        $region32: #{net_prox_dgd_forward.1} parent=23 // pred_fallthru
          _
        // Predicated region
        $region33: #{net_prox_dgd_forward.1} parent=23 // pred_check
          %p229 = pneg %p139
        $region34: #{net_prox_dgd_forward.1} parent=23 // pred_check_branch
          %231 = sbr.rel (%p229) target = $region36
        $region35: #{net_prox_dgd_forward.1} parent=23 // pred_region
          %p232 = scmp.lt.s32.totalorder %s20, 1
          %s233 = scalar_select %p232, %s20, 1
          %s234 = smul.addr %s233, 8
          %s235 = scalar_lea.vmem %s4, %s234
        $region36: #{net_prox_dgd_forward.1} parent=23 // pred_fallthru
          _
      $region24: #{net_prox_dgd_forward.1} parent=5 // pred_fallthru
        _
      %p236 = scmp.le.s32.totalorder 1, %s13
      %p237 = scmp.lt.s32.totalorder %s13, 9
      %p238 = pnand %p236, %p237
      %p239 = pneg %p238
      // Predicated region
      $region37: #{net_prox_dgd_forward.1} parent=5 // pred_check
        _
      $region38: #{net_prox_dgd_forward.1} parent=5 // pred_check_branch
        %241 = sbr.rel (%p238) target = $region40
      $region39: #{net_prox_dgd_forward.1} parent=5 // pred_region
        %s242 = ssub.s32 %s13, 1
        // Predicated region
        $region41: #{net_prox_dgd_forward.1} parent=39 // pred_check
          %p243 = pneg %p46
        $region42: #{net_prox_dgd_forward.1} parent=39 // pred_check_branch
          %245 = sbr.rel (%p243) target = $region44
        $region43: #{net_prox_dgd_forward.1} parent=39 // pred_region
          %246 = dma.done [#allocation4], 16
        $region44: #{net_prox_dgd_forward.1} parent=39 // pred_fallthru
          _
        // Predicated region
        $region45: #{net_prox_dgd_forward.1} parent=39 // pred_check
          %p247 = pneg %p67
        $region46: #{net_prox_dgd_forward.1} parent=39 // pred_check_branch
          %249 = sbr.rel (%p247) target = $region48
        $region47: #{net_prox_dgd_forward.1} parent=39 // pred_region
          %250 = dma.done [#allocation6], 16
        $region48: #{net_prox_dgd_forward.1} parent=39 // pred_fallthru
          _
        %251 = sfence
        %p252 = pneg %p46
        %p253 = pneg %p43
        %p254 = pneg %p67
        %p255 = pneg %p64
        %p256 = scmp.lt.s32.totalorder %s22, 1
        %s257 = scalar_select %p256, %s22, 1
        %s258 = smul.addr %s257, 8
        %s259 = scalar_lea.vmem %s2, %s258
        %p260 = pneg %p93
        %p261 = pneg %p90
        %p262 = scmp.lt.s32.totalorder %s22, 1
        %s263 = scalar_select %p262, %s22, 1
        %s264 = smul.addr %s263, 16
        %s265 = smul.addr %s264, 8
        %s266 = scalar_lea.vmem %s3, %s265
        %p267 = pneg %p119
        %p268 = pneg %p116
        %p269 = scmp.lt.s32.totalorder %s22, 1
        %s270 = scalar_select %p269, %s22, 1
        %s271 = smul.addr %s270, 8
        %s272 = scalar_lea.vmem %s4, %s271
        %p273 = pneg %p145
        %p274 = pneg %p142
        %p275 = pneg %p173
        %p276 = pneg %p170
        %p277 = scmp.lt.s32.totalorder %s23, 3
        %s278 = scalar_select %p277, %s23, 3
        %p279 = scmp.lt.s32.totalorder %s22, 1
        %s280 = scalar_select %p279, %s22, 1
        %s281 = smul.addr %s278, 2
        %s282 = sadd.s32 %s280, %s281
        %s283 = smul.addr %s282, 8
        %s284 = scalar_lea.vmem %s5, %s283
        %p285 = scmp.lt.s32.totalorder %s22, 1
        %s286 = scalar_select %p285, %s22, 1
        %s287 = smul.addr %s286, 8
        %s288 = scalar_lea.vmem %s2, %s287
        %p289 = scmp.lt.s32.totalorder %s22, 1
        %s290 = scalar_select %p289, %s22, 1
        %s291 = smul.addr %s290, 16
        %s292 = smul.addr %s291, 8
        %s293 = scalar_lea.vmem %s3, %s292
        %p294 = scmp.lt.s32.totalorder %s22, 1
        %s295 = scalar_select %p294, %s22, 1
        %s296 = smul.addr %s295, 8
        %s297 = scalar_lea.vmem %s4, %s296
        %p298 = scmp.lt.s32.totalorder %s23, 3
        %s299 = scalar_select %p298, %s23, 3
        %p300 = scmp.lt.s32.totalorder %s22, 1
        %s301 = scalar_select %p300, %s22, 1
        %s302 = smul.addr %s299, 2
        %s303 = sadd.s32 %s301, %s302
        %s304 = smul.addr %s303, 8
        %s305 = scalar_lea.vmem %s5, %s304
        %p306 = scmp.eq.s32.totalorder %s23, 0
        // Predicated region
        $region49: #{net_prox_dgd_forward.1} parent=39 // pred_check
          %p307 = pneg %p306
        $region50: #{net_prox_dgd_forward.1} parent=39 // pred_check_branch
          %309 = sbr.rel (%p307) target = $region52
        $region51: #{net_prox_dgd_forward.1} parent=39 // pred_region
          %vm310 = vcmask 130048
          %311 = vst.msk [vmem:[#allocation2] sm:$0xff] %vm310, 0.0
        $region52: #{net_prox_dgd_forward.1} parent=39 // pred_fallthru
          _
        %v312 = vld [vmem:[%s288] sm:$0xff]
        %v313 = vld [vmem:[%s293] sm:$0xff]
        %v314 = vld [vmem:[%s293 + $0x8] sm:$0xff]
        %v315 = vld [vmem:[%s293 + $0x10] sm:$0xff]
        %v316 = vld [vmem:[%s293 + $0x18] sm:$0xff]
        %v317 = vld [vmem:[%s293 + $0x20] sm:$0xff]
        %v318 = vld [vmem:[%s293 + $0x28] sm:$0xff]
        %v319 = vld [vmem:[%s293 + $0x30] sm:$0xff]
        %v320 = vld [vmem:[%s293 + $0x38] sm:$0xff]
        %v321 = vld [vmem:[%s293 + $0x40] sm:$0xff]
        %v322 = vld [vmem:[%s293 + $0x48] sm:$0xff]
        %v323 = vld [vmem:[%s293 + $0x50] sm:$0xff]
        %v324 = vld [vmem:[%s293 + $0x58] sm:$0xff]
        %v325 = vld [vmem:[%s293 + $0x60] sm:$0xff]
        %v326 = vld [vmem:[%s293 + $0x68] sm:$0xff]
        %v327 = vld [vmem:[%s293 + $0x70] sm:$0xff]
        %v328 = vld [vmem:[%s293 + $0x78] sm:$0xff]
        %v329 = vld [vmem:[%s297] sm:$0xff]
        %v330 = vld [vmem:[#allocation2] sm:$0xff]
        %vm331 = vcmask 64512
        %v333 = vsel %vm331, %v312, 0
        %335 = vmatprep.subr.mxu0 0.0
        %336 = vmatpush1.msra.mxu0 %v330
        %337 = vmatprep.subr.mxu0 0.0
        %338 = vmatpush1.msra.mxu0 0.0
        %339 = vmatprep.subr.mxu0 0.0
        %340 = vmatpush1.msra.mxu0 0.0
        %341 = vmatprep.subr.mxu0 0.0
        %342 = vmatpush1.msra.mxu0 0.0
        %343 = vmatprep.subr.mxu0 0.0
        %344 = vmatpush1.msra.mxu0 0.0
        %345 = vmatprep.subr.mxu0 0.0
        %346 = vmatpush1.msra.mxu0 0.0
        %347 = vmatprep.subr.mxu0 0.0
        %348 = vmatpush1.msra.mxu0 0.0
        %349 = vmatprep.subr.mxu0 0.0
        %350 = vmatpush1.msra.mxu0 0.0
        %351 = vmatprep.subr.mxu0 0.0
        %352 = vmatpush1.msra.mxu0 0.0
        %353 = vmatprep.subr.mxu0 0.0
        %354 = vmatpush1.msra.mxu0 0.0
        %355 = vmatprep.subr.mxu0 0.0
        %356 = vmatpush1.msra.mxu0 0.0
        %357 = vmatprep.subr.mxu0 0.0
        %358 = vmatpush1.msra.mxu0 0.0
        %359 = vmatprep.subr.mxu0 0.0
        %360 = vmatpush1.msra.mxu0 0.0
        %361 = vmatprep.subr.mxu0 0.0
        %362 = vmatpush1.msra.mxu0 0.0
        %363 = vmatprep.subr.mxu0 0.0
        %364 = vmatpush1.msra.mxu0 0.0
        %365 = vmatprep.subr.mxu0 0.0
        %366 = vmatpush1.msra.mxu0 0.0
        %367 = vmatprep.subr.mxu0 0.0
        %368 = vmatpush1.msra.mxu0 0.0
        %369 = vmatprep.subr.mxu0 0.0
        %370 = vmatpush1.msra.mxu0 0.0
        %371 = vmatprep.subr.mxu0 0.0
        %372 = vmatpush1.msra.mxu0 0.0
        %373 = vmatprep.subr.mxu0 0.0
        %374 = vmatpush1.msra.mxu0 0.0
        %375 = vmatprep.subr.mxu0 0.0
        %376 = vmatpush1.msra.mxu0 0.0
        %377 = vmatprep.subr.mxu0 0.0
        %378 = vmatpush1.msra.mxu0 0.0
        %379 = vmatprep.subr.mxu0 0.0
        %380 = vmatpush1.msra.mxu0 0.0
        %381 = vmatprep.subr.mxu0 0.0
        %382 = vmatpush1.msra.mxu0 0.0
        %383 = vmatprep.subr.mxu0 0.0
        %384 = vmatpush1.msra.mxu0 0.0
        %385 = vmatprep.subr.mxu0 0.0
        %386 = vmatpush1.msra.mxu0 0.0
        %387 = vmatprep.subr.mxu0 0.0
        %388 = vmatpush1.msra.mxu0 0.0
        %389 = vmatprep.subr.mxu0 0.0
        %390 = vmatpush1.msra.mxu0 0.0
        %391 = vmatprep.subr.mxu0 0.0
        %392 = vmatpush1.msra.mxu0 0.0
        %393 = vmatprep.subr.mxu0 0.0
        %394 = vmatpush1.msra.mxu0 0.0
        %395 = vmatprep.subr.mxu0 0.0
        %396 = vmatpush1.msra.mxu0 0.0
        %397 = vmatprep.subr.mxu0 0.0
        %398 = vmatpush1.msra.mxu0 0.0
        %399 = vmatprep.mubr.f32.mxu0 0.0
        %400 = vmatmul.mubr.f32.gmra.mrb[0].mxu0 %v333
        %v401 = vpop.f32.mrb[0].mxu0
        %v402 = vadd.f32 0.0, %v401
        %v403 = vpop.f32.mrb[0].mxu0
        %404 = vdwg.mxu0
        %v405 = vlaneseq
        %v406 = vshrl.u32 %v405, 7
        %v407 = vsub.s32 0, %v406
        %v408 = vrot.slane %v330, %v407
        %v409 = vmul.f32 %v313, %v408
        %v410 = vmul.f32 %v314, %v408
        %vm411 = vcmask 130048
        %v412 = vsel %vm411, %v409, 0.0
        %413 = vadd.xlane.f32.xlu0 %v412
        %v414 = vpop.xlane.xlu0 %413
        %v415 = vsel %vm411, %v410, 0.0
        %416 = vadd.xlane.f32.xlu0 %v415
        %v417 = vpop.xlane.xlu0 %416
        %v418 = vlaneseq
        %v419 = vshrl.u32 %v418, 7
        %v420 = vsub.s32 1, %v419
        %v421 = vrot.slane %v330, %v420
        %v422 = vmul.f32 %v315, %v421
        %v423 = vmul.f32 %v316, %v421
        %v424 = vsel %vm411, %v422, 0.0
        %425 = vadd.xlane.f32.xlu0 %v424
        %v426 = vpop.xlane.xlu0 %425
        %v427 = vsel %vm411, %v423, 0.0
        %428 = vadd.xlane.f32.xlu0 %v427
        %v429 = vpop.xlane.xlu0 %428
        %v430 = vlaneseq
        %v431 = vshrl.u32 %v430, 7
        %v432 = vsub.s32 2, %v431
        %v433 = vrot.slane %v330, %v432
        %v434 = vmul.f32 %v317, %v433
        %v435 = vmul.f32 %v318, %v433
        %v436 = vsel %vm411, %v434, 0.0
        %437 = vadd.xlane.f32.xlu0 %v436
        %v438 = vpop.xlane.xlu0 %437
        %v439 = vsel %vm411, %v435, 0.0
        %440 = vadd.xlane.f32.xlu0 %v439
        %v441 = vpop.xlane.xlu0 %440
        %v442 = vlaneseq
        %v443 = vshrl.u32 %v442, 7
        %v444 = vsub.s32 3, %v443
        %v445 = vrot.slane %v330, %v444
        %v446 = vmul.f32 %v319, %v445
        %v447 = vmul.f32 %v320, %v445
        %v448 = vsel %vm411, %v446, 0.0
        %449 = vadd.xlane.f32.xlu0 %v448
        %v450 = vpop.xlane.xlu0 %449
        %v451 = vsel %vm411, %v447, 0.0
        %452 = vadd.xlane.f32.xlu0 %v451
        %v453 = vpop.xlane.xlu0 %452
        %v454 = vlaneseq
        %v455 = vshrl.u32 %v454, 7
        %v456 = vsub.s32 4, %v455
        %v457 = vrot.slane %v330, %v456
        %v458 = vmul.f32 %v321, %v457
        %v459 = vmul.f32 %v322, %v457
        %v460 = vsel %vm411, %v458, 0.0
        %461 = vadd.xlane.f32.xlu0 %v460
        %v462 = vpop.xlane.xlu0 %461
        %v463 = vsel %vm411, %v459, 0.0
        %464 = vadd.xlane.f32.xlu0 %v463
        %v465 = vpop.xlane.xlu0 %464
        %v466 = vlaneseq
        %v467 = vshrl.u32 %v466, 7
        %v468 = vsub.s32 5, %v467
        %v469 = vrot.slane %v330, %v468
        %v470 = vmul.f32 %v323, %v469
        %v471 = vmul.f32 %v324, %v469
        %v472 = vsel %vm411, %v470, 0.0
        %473 = vadd.xlane.f32.xlu0 %v472
        %v474 = vpop.xlane.xlu0 %473
        %v475 = vsel %vm411, %v471, 0.0
        %476 = vadd.xlane.f32.xlu0 %v475
        %v477 = vpop.xlane.xlu0 %476
        %v478 = vlaneseq
        %v479 = vshrl.u32 %v478, 7
        %v480 = vsub.s32 6, %v479
        %v481 = vrot.slane %v330, %v480
        %v482 = vmul.f32 %v325, %v481
        %v483 = vmul.f32 %v326, %v481
        %v484 = vsel %vm411, %v482, 0.0
        %485 = vadd.xlane.f32.xlu0 %v484
        %v486 = vpop.xlane.xlu0 %485
        %v487 = vsel %vm411, %v483, 0.0
        %488 = vadd.xlane.f32.xlu0 %v487
        %v489 = vpop.xlane.xlu0 %488
        %v490 = vlaneseq
        %v491 = vshrl.u32 %v490, 7
        %v492 = vsub.s32 7, %v491
        %v493 = vrot.slane %v330, %v492
        %v494 = vmul.f32 %v327, %v493
        %v495 = vmul.f32 %v328, %v493
        %v496 = vsel %vm411, %v494, 0.0
        %497 = vadd.xlane.f32.xlu0 %v496
        %v498 = vpop.xlane.xlu0 %497
        %v499 = vsel %vm411, %v495, 0.0
        %500 = vadd.xlane.f32.xlu0 %v499
        %v501 = vpop.xlane.xlu0 %500
        %v504 = vlaneseq
        %v505 = vand.u32 %v504, 127
        %v506 = vlaneseq
        %v507 = vshrl.u32 %v506, 7
        %v508 = vsub.s32 %v505, %v507
        %v509 = vrot.slane %v414, %v508
        %v510 = vadd.s32 %v505, 4294967288
        %v511 = vlaneseq
        %v512 = vshrl.u32 %v511, 7
        %v513 = vsub.s32 %v510, %v512
        %v514 = vrot.slane %v417, %v513
        %vm515 = vcmask 130112
        %v516 = vsel %vm515, %v514, %v509
        %v520 = vlaneseq
        %v521 = vshrl.u32 %v520, 7
        %v522 = vsub.s32 %v505, %v521
        %v523 = vrot.slane %v426, %v522
        %v524 = vlaneseq
        %v525 = vshrl.u32 %v524, 7
        %v526 = vsub.s32 %v510, %v525
        %v527 = vrot.slane %v429, %v526
        %v528 = vsel %vm515, %v527, %v523
        %v532 = vlaneseq
        %v533 = vshrl.u32 %v532, 7
        %v534 = vsub.s32 %v505, %v533
        %v535 = vrot.slane %v438, %v534
        %v536 = vlaneseq
        %v537 = vshrl.u32 %v536, 7
        %v538 = vsub.s32 %v510, %v537
        %v539 = vrot.slane %v441, %v538
        %v540 = vsel %vm515, %v539, %v535
        %v544 = vlaneseq
        %v545 = vshrl.u32 %v544, 7
        %v546 = vsub.s32 %v505, %v545
        %v547 = vrot.slane %v450, %v546
        %v548 = vlaneseq
        %v549 = vshrl.u32 %v548, 7
        %v550 = vsub.s32 %v510, %v549
        %v551 = vrot.slane %v453, %v550
        %v552 = vsel %vm515, %v551, %v547
        %v556 = vlaneseq
        %v557 = vshrl.u32 %v556, 7
        %v558 = vsub.s32 %v505, %v557
        %v559 = vrot.slane %v462, %v558
        %v560 = vlaneseq
        %v561 = vshrl.u32 %v560, 7
        %v562 = vsub.s32 %v510, %v561
        %v563 = vrot.slane %v465, %v562
        %v564 = vsel %vm515, %v563, %v559
        %v568 = vlaneseq
        %v569 = vshrl.u32 %v568, 7
        %v570 = vsub.s32 %v505, %v569
        %v571 = vrot.slane %v474, %v570
        %v572 = vlaneseq
        %v573 = vshrl.u32 %v572, 7
        %v574 = vsub.s32 %v510, %v573
        %v575 = vrot.slane %v477, %v574
        %v576 = vsel %vm515, %v575, %v571
        %v580 = vlaneseq
        %v581 = vshrl.u32 %v580, 7
        %v582 = vsub.s32 %v505, %v581
        %v583 = vrot.slane %v486, %v582
        %v584 = vlaneseq
        %v585 = vshrl.u32 %v584, 7
        %v586 = vsub.s32 %v510, %v585
        %v587 = vrot.slane %v489, %v586
        %v588 = vsel %vm515, %v587, %v583
        %v592 = vlaneseq
        %v593 = vshrl.u32 %v592, 7
        %v594 = vsub.s32 %v505, %v593
        %v595 = vrot.slane %v498, %v594
        %v596 = vlaneseq
        %v597 = vshrl.u32 %v596, 7
        %v598 = vsub.s32 %v510, %v597
        %v599 = vrot.slane %v501, %v598
        %v600 = vsel %vm515, %v599, %v595
        %vm602 = vcmask 1040384
        %v603 = vsel %vm602, %v516, %v528
        %vm604 = vcmask 1041408
        %v605 = vsel %vm604, %v603, %v540
        %vm606 = vcmask 1042432
        %v607 = vsel %vm606, %v605, %v552
        %vm608 = vcmask 1043456
        %v609 = vsel %vm608, %v607, %v564
        %vm610 = vcmask 1044480
        %v611 = vsel %vm610, %v609, %v576
        %vm612 = vcmask 1045504
        %v613 = vsel %vm612, %v611, %v588
        %vm614 = vcmask 1046528
        %v615 = vsel %vm614, %v613, %v600
        %v616 = vsub.f32 %v615, %v329
        %s617 = sld [smem:[#allocation3 + %s23]]
        %s618 = sld [smem:[#allocation5 + %s23]]
        %v619 = vstv %s617
        %v620 = vmul.f32 %v619, %v616
        %v621 = vsub.f32 %v402, %v620
        %v622 = vstv %s618
        %v623 = vsub.f32 %v621, %v622
        %v624 = vmax.f32 %v623, 0.0
        %v625 = vsub.f32 0.0, %v621
        %v626 = vsub.f32 %v625, %v622
        %v627 = vmax.f32 %v626, 0.0
        %v628 = vsub.f32 %v624, %v627
        %629 = vst.msk [vmem:[#allocation2] sm:$0xff] %vm411, %v628
        %630 = vst.msk [vmem:[%s305] sm:$0xff] %vm411, %v628
        %p631 = scmp.lt.s32.totalorder %s23, 3
        %s632 = scalar_select %p631, %s23, 3
        %p633 = scmp.lt.s32.totalorder %s22, 1
        %s634 = scalar_select %p633, %s22, 1
        %s635 = smul.addr %s632, 2
        %s636 = sadd.s32 %s634, %s635
        %s637 = smul.addr %s636, 8
        %s638 = scalar_lea.vmem %s5, %s637
        // Predicated region
        $region53: #{net_prox_dgd_forward.1} parent=39 // pred_check
          %p639 = pneg %p170
        $region54: #{net_prox_dgd_forward.1} parent=39 // pred_check_branch
          %641 = sbr.rel (%p639) target = $region56
        $region55: #{net_prox_dgd_forward.1} parent=39 // pred_region
          _
        $region56: #{net_prox_dgd_forward.1} parent=39 // pred_fallthru
          _
      $region40: #{net_prox_dgd_forward.1} parent=5 // pred_fallthru
        _
      %p642 = scmp.le.s32.totalorder 2, %s13
      // Predicated region
      $region57: #{net_prox_dgd_forward.1} parent=5 // pred_check
        %p643 = pneg %p642
      $region58: #{net_prox_dgd_forward.1} parent=5 // pred_check_branch
        %645 = sbr.rel (%p643) target = $region60
      $region59: #{net_prox_dgd_forward.1} parent=5 // pred_region
        %s646 = ssub.s32 %s13, 2
        // Predicated region
        $region61: #{net_prox_dgd_forward.1} parent=59 // pred_check
          %p647 = pneg %p176
        $region62: #{net_prox_dgd_forward.1} parent=59 // pred_check_branch
          %649 = sbr.rel (%p647) target = $region64
        $region63: #{net_prox_dgd_forward.1} parent=59 // pred_region
          %p650 = scmp.lt.s32.totalorder %s25, 3
          %s651 = scalar_select %p650, %s25, 3
          %p652 = scmp.lt.s32.totalorder %s24, 1
          %s653 = scalar_select %p652, %s24, 1
          %s654 = smul.addr %s651, 2
          %s655 = sadd.s32 %s653, %s654
          %s656 = smul.addr %s655, 8
          %s657 = scalar_lea.vmem %s5, %s656
        $region64: #{net_prox_dgd_forward.1} parent=59 // pred_fallthru
          _
      $region60: #{net_prox_dgd_forward.1} parent=5 // pred_fallthru
        _
    $region6: #{net_prox_dgd_forward.1} parent=1 // loop_footer
      %s17 = sadd.s32 1, %s13
    $region7: #{net_prox_dgd_forward.1} parent=1 // loop_footer_branch
      %12 = sbr.rel target = $region3
    $region8: #{net_prox_dgd_forward.1} parent=1 // loop_exit
      _
    %658 = vsyncpa [#allocation4], 1
    %s659 = scalar_lea.sflag [#allocation4], 1
    %660 = vsyncpa %s659, 1
    %661 = vsyncpa [#allocation6], 1

</llo_original>
